<compile_context>
chip_gen: v5e
topology: v5e:2x2
jax: 0.10.0
libtpu: 0.0.40
codegen_flags: <defaults>
</compile_context>

<pallas_src>
import functools

import jax
import jax.numpy as jnp
from jax.experimental import pallas as pl
from jax.experimental.pallas import tpu as pltpu

BOARD_SIZE = 8
N_MOVES = BOARD_SIZE ** 2  # 64
N_COLS = N_MOVES + 1       # 65


def _round_up(x, m):
    return ((x + m - 1) // m) * m


def _cdiv(a, b):
    return (a + b - 1) // b


def _alphazero_loss_kernel(pmask_ref, out_ref, lab_ref, part_ref, *,
                           n_rows_valid):
    """One batch tile: fused policy+value contribution, per-row partial sums.

    pmask_ref: (1, W) f32, 1.0 on policy lanes / 0.0 on value lanes (resident).
    out_ref/lab_ref: (tm, W) blocks of the lane-packed outputs / labels.
    part_ref: (tm, 1) per-row partial sums (garbage rows forced to 0).
    """
    o = out_ref[...].astype(jnp.float32)          # (tm, W)
    l = lab_ref[...].astype(jnp.float32)          # (tm, W)
    p = pmask_ref[...]                            # (1, W), broadcasts over rows
    one_minus_p = 1.0 - p                         # (1, W)

    # Policy lanes: -pi * log(prob); value lanes: (pred - winner)^2.
    # Float-mask arithmetic keeps every op a plain broadcasted VPU mul/add and
    # feeds log(1.0) = 0 on value lanes so they contribute exactly 0 there.
    log_term = (-(l * p)) * jnp.log(o * p + one_minus_p)
    sq_term = jnp.square(o - l) * one_minus_p
    contrib = log_term + sq_term                  # (tm, W)

    # Reduce lanes first, then zero the rows that fall beyond the real batch.
    # Ragged last tiles read unspecified data, confined to whole rows, so this
    # outermost select removes it completely (NaN/Inf included).
    row_sum = jnp.sum(contrib, axis=1, keepdims=True)        # (tm, 1)
    tm = out_ref.shape[0]
    row_id = (pl.program_id(0) * tm
              + jax.lax.broadcasted_iota(jnp.int32, (tm, 1), 0))
    part_ref[...] = jnp.where(row_id < n_rows_valid, row_sum, 0.0)


def alphazero_loss(outputs, labels, *, block_bytes=2 << 20):
    """outputs, labels: (B, 65) float arrays. Returns scalar float32 loss."""
    B, C = outputs.shape
    assert C == N_COLS, f"expected {N_COLS} columns, got {C}"
    assert labels.shape == (B, C)

    # Lane-dense packing factor: fold G batch rows into one kernel row (free
    # contiguous reshape).  Keep at least 8 packed rows so vreg sublanes stay
    # populated.
    G = 1
    for g in (128, 64, 32, 16, 8, 4, 2):
        if B % g == 0 and B // g >= 8:
            G = g
            break
    W = C * G
    n_rows = B // G
    out2 = outputs.reshape(n_rows, W)
    lab2 = labels.reshape(n_rows, W)

    # Per-lane policy/value mask (tiny; DMA'd once thanks to the constant
    # index map below).
    lane_col = jnp.arange(W, dtype=jnp.int32) % C
    pmask = (lane_col < N_MOVES).astype(jnp.float32).reshape(1, W)

    # Tile rows: ~block_bytes of input per pipeline buffer (VMEM pads W up to
    # a lane multiple), a multiple of 8 sublanes, capped so the grid has >= 2
    # steps (v7x megacore) whenever there is enough work.
    itemsize = jnp.dtype(outputs.dtype).itemsize
    w_pad = _round_up(W, 128)
    if n_rows <= 8:
        tm = n_rows                       # single full block (tiny input)
    else:
        tm = max(8, (block_bytes // (w_pad * itemsize)) // 8 * 8)
        tm = min(tm, _round_up(_cdiv(n_rows, 2), 8))
    grid_n = _cdiv(n_rows, tm)

    # 2 inputs x 2 pipeline buffers (+ resident mask + partials).  Only raise
    # the scoped-VMEM limit if a large block_bytes actually needs it.
    vmem_need = 4 * tm * w_pad * itemsize + 2 * w_pad * 4 + 2 * tm * 4
    params = dict(dimension_semantics=("parallel",))
    if vmem_need > 12 * 1024 * 1024:
        params["vmem_limit_bytes"] = min(vmem_need + (4 << 20), 48 << 20)

    kernel = functools.partial(_alphazero_loss_kernel, n_rows_valid=n_rows)

    partials = pl.pallas_call(
        kernel,
        out_shape=jax.ShapeDtypeStruct((grid_n * tm, 1), jnp.float32),
        grid=(grid_n,),
        in_specs=[
            pl.BlockSpec((1, W), lambda i: (0, 0)),    # policy-lane mask
            pl.BlockSpec((tm, W), lambda i: (i, 0)),   # outputs (packed)
            pl.BlockSpec((tm, W), lambda i: (i, 0)),   # labels (packed)
        ],
        out_specs=pl.BlockSpec((tm, 1), lambda i: (i, 0)),
        compiler_params=pltpu.CompilerParams(**params),
        cost_estimate=pl.CostEstimate(
            flops=10 * B * C,
            transcendentals=B * C,
            bytes_accessed=2 * B * C * itemsize + 4 * W + 4 * grid_n * tm),
    )(pmask, out2, lab2)

    # Tiny cross-tile reduction + normalisation in plain JAX.
    return jnp.sum(partials) / jnp.float32(B)


def alphazero_loss_ref(outputs, labels):
    """Pure-JAX reference matching the PyTorch forward (f32 internal math)."""
    B = outputs.shape[0]
    move_probs = outputs[:, :N_MOVES].astype(jnp.float32)
    pred_vals = outputs[:, N_MOVES:].astype(jnp.float32)
    search_probs = labels[:, :N_MOVES].astype(jnp.float32)
    winners = labels[:, N_MOVES:].astype(jnp.float32)
    loss = jnp.sum(jnp.square(pred_vals - winners)) - jnp.vdot(
        search_probs, jnp.log(move_probs))
    return loss / B


if __name__ == "__main__":
    key = jax.random.PRNGKey(0)

    def make_inputs(k, batch, dtype=jnp.float32):
        k1, k2, k3, k4 = jax.random.split(k, 4)
        # Network outputs: softmax move probabilities (strictly > 0 so the log
        # is finite) and a tanh-bounded value prediction.
        move_probs = jax.nn.softmax(
            jax.random.normal(k1, (batch, N_MOVES), jnp.float32), axis=-1)
        pred_vals = jnp.tanh(jax.random.normal(k2, (batch, 1), jnp.float32))
        outputs = jnp.concatenate([move_probs, pred_vals], axis=1).astype(dtype)
        # Labels: MCTS visit distribution and game winner in {-1, +1}.
        search_probs = jax.nn.softmax(
            jax.random.normal(k3, (batch, N_MOVES), jnp.float32), axis=-1)
        winners = jnp.sign(jax.random.normal(k4, (batch, 1), jnp.float32))
        labels = jnp.concatenate([search_probs, winners], axis=1).astype(dtype)
        return outputs, labels

    keys = jax.random.split(key, 5)
    cases = [
        (keys[0], 4, jnp.float32),     # tiny: single (4, 65) block
        (keys[1], 8, jnp.float32),     # G=1, single 8-row block
        (keys[2], 13, jnp.float32),    # G=1, ragged 2-step grid (row mask)
        (keys[3], 200, jnp.float32),   # G=8 lane packing, ragged 2-step grid
        (keys[4], 128, jnp.bfloat16),  # G=16 lane packing, bf16 fast path
    ]
    for k, batch, dtype in cases:
        o, lab = make_inputs(k, batch, dtype)
        got = jax.block_until_ready(alphazero_loss(o, lab))
        want = jax.block_until_ready(alphazero_loss_ref(o, lab))
        assert jnp.allclose(got, want, rtol=1e-4, atol=1e-4), (
            batch, str(dtype), got, want)

    print("KERNEL_OK")
</pallas_src>

<mosaic_0001>
module attributes {stable_mosaic.version = 11 : i64} {
  func.func @_alphazero_loss_kernel(%arg0: i32, %arg1: memref<1x65xf32, #tpu.memory_space<vmem>>, %arg2: memref<4x65xf32, #tpu.memory_space<vmem>>, %arg3: memref<4x65xf32, #tpu.memory_space<vmem>>, %arg4: memref<4x1xf32, #tpu.memory_space<vmem>>) attributes {dimension_semantics = [#tpu.dimension_semantics<parallel>], iteration_bounds = array<i64: 1>, scalar_prefetch = 0 : i64, scratch_operands = 0 : i64, tpu.core_type = #tpu.core_type<tc>, window_params = [{pipeline_mode = #tpu.pipeline_mode<synchronous>, transform_indices = @transform_0, window_bounds = array<i64: 1, 65>}, {transform_indices = @transform_1, window_bounds = array<i64: 4, 65>}, {transform_indices = @transform_2, window_bounds = array<i64: 4, 65>}, {transform_indices = @transform_3, window_bounds = array<i64: 4, 1>}]} {
    %c0 = arith.constant 0 : index
    %c0_0 = arith.constant 0 : index
    %0 = vector.load %arg2[%c0, %c0_0] : memref<4x65xf32, #tpu.memory_space<vmem>>, vector<4x65xf32>
    %c0_1 = arith.constant 0 : index
    %c0_2 = arith.constant 0 : index
    %1 = vector.load %arg3[%c0_1, %c0_2] : memref<4x65xf32, #tpu.memory_space<vmem>>, vector<4x65xf32>
    %c0_3 = arith.constant 0 : index
    %c0_4 = arith.constant 0 : index
    %2 = vector.load %arg1[%c0_3, %c0_4] : memref<1x65xf32, #tpu.memory_space<vmem>>, vector<1x65xf32>
    %cst = arith.constant 1.000000e+00 : f32
    %3 = vector.broadcast %cst : f32 to vector<1x65xf32>
    %4 = arith.subf %3, %2 : vector<1x65xf32>
    %5 = vector.broadcast %2 : vector<1x65xf32> to vector<4x65xf32>
    %6 = arith.mulf %1, %5 : vector<4x65xf32>
    %cst_5 = arith.constant 0.000000e+00 : f32
    %7 = vector.broadcast %cst_5 : f32 to vector<4x65xf32>
    %8 = arith.subf %7, %6 : vector<4x65xf32>
    %9 = vector.broadcast %2 : vector<1x65xf32> to vector<4x65xf32>
    %10 = arith.mulf %0, %9 : vector<4x65xf32>
    %11 = vector.broadcast %4 : vector<1x65xf32> to vector<4x65xf32>
    %12 = arith.addf %10, %11 : vector<4x65xf32>
    %13 = math.log %12 : vector<4x65xf32>
    %14 = arith.mulf %8, %13 : vector<4x65xf32>
    %15 = arith.subf %0, %1 : vector<4x65xf32>
    %16 = arith.mulf %15, %15 : vector<4x65xf32>
    %17 = vector.broadcast %4 : vector<1x65xf32> to vector<4x65xf32>
    %18 = arith.mulf %16, %17 : vector<4x65xf32>
    %19 = arith.addf %14, %18 : vector<4x65xf32>
    %cst_6 = arith.constant dense<0.000000e+00> : vector<4xf32>
    %20 = vector.multi_reduction <add>, %19, %cst_6 [1] : vector<4x65xf32> to vector<4xf32>
    %21 = vector.shape_cast %20 : vector<4xf32> to vector<4x1xf32>
    %c4_i32 = arith.constant 4 : i32
    %22 = arith.muli %arg0, %c4_i32 : i32
    %23 = tpu.iota {dimensions = array<i32: 0>} : vector<4x1xi32>
    %24 = vector.broadcast %22 : i32 to vector<4x1xi32>
    %25 = arith.addi %24, %23 : vector<4x1xi32>
    %c4_i32_7 = arith.constant 4 : i32
    %26 = vector.broadcast %c4_i32_7 : i32 to vector<4x1xi32>
    %27 = arith.cmpi slt, %25, %26 : vector<4x1xi32>
    %cst_8 = arith.constant 0.000000e+00 : f32
    %28 = vector.broadcast %cst_8 : f32 to vector<4x1xf32>
    %29 = arith.select %27, %21, %28 : vector<4x1xi1>, vector<4x1xf32>
    %c0_9 = arith.constant 0 : index
    %c0_10 = arith.constant 0 : index
    %30 = vector.load %arg4[%c0_9, %c0_10] : memref<4x1xf32, #tpu.memory_space<vmem>>, vector<4x1xf32>
    tpu.vector_store %arg4[%c0_9, %c0_10], %29 {strides = array<i32>} : memref<4x1xf32, #tpu.memory_space<vmem>>, vector<4x1xf32>,
    return
  }
  func.func @transform_0(%arg0: i32) -> (i32, i32) {
    %c0_i32 = arith.constant 0 : i32
    %c0_i32_0 = arith.constant 0 : i32
    %c0_i32_1 = arith.constant 0 : i32
    return %c0_i32, %c0_i32_0 : i32, i32
  }
  func.func @transform_1(%arg0: i32) -> (i32, i32) {
    %c0_i32 = arith.constant 0 : i32
    %c0_i32_0 = arith.constant 0 : i32
    return %arg0, %c0_i32 : i32, i32
  }
  func.func @transform_2(%arg0: i32) -> (i32, i32) {
    %c0_i32 = arith.constant 0 : i32
    %c0_i32_0 = arith.constant 0 : i32
    return %arg0, %c0_i32 : i32, i32
  }
  func.func @transform_3(%arg0: i32) -> (i32, i32) {
    %c0_i32 = arith.constant 0 : i32
    %c0_i32_0 = arith.constant 0 : i32
    return %arg0, %c0_i32 : i32, i32
  }
}

</mosaic_0001>

<llo_original>
// kernel: tpu_custom_call.1
$region0: #{tpu_custom_call.1}
  #allocation0 [shape = 'u32[]', space=smem, size = 0x4, offset = 0x4, fixed_abs, tag = 'smem constant byte address 0x4 - core index']
  #allocation1 [shape = 'u32[72,128]{1,0:T(1,128)}', space=vmem, size = 0x9000, scoped, tag = 'internal scratch']
  %s0 = inlined_call_operand.hbm [shape: f32[1,65], index: 0, kind: input, shape index: {}]
  %s1 = inlined_call_operand.hbm [shape: f32[4,65], index: 1, kind: input, shape index: {}]
  %s2 = inlined_call_operand.hbm [shape: f32[4,65], index: 2, kind: input, shape index: {}]
  %s3 = inlined_call_operand.vmem [shape: f32[4,1], index: 3, kind: output, shape index: {}]
  %s4 = sld [smem:[#allocation0]]
  $region34: #{tpu_custom_call.1} parent=0
    _
  %s6 = ssub.s32 1, %s4
  %s7 = scalar_select 0, %s6, %s4
  $region1: #{tpu_custom_call.1} parent=0
    #allocation2 [shape = 'u8[512]{0}', space=vmem, size = 0x400, scoped, tag = 'input window, operand 0, single buffered']
    #allocation3 [shape = 's32[1]{0}', space=sflag, size = 0x4, scoped, tag = 'scoped memory for tpu_custom_call.1']
    #allocation4 [shape = 'u8[2048]{0}', space=vmem, size = 0x800, scoped, tag = 'input window, operand 1, single buffered']
    #allocation5 [shape = 's32[1]{0}', space=sflag, size = 0x4, scoped, tag = 'scoped memory for tpu_custom_call.1']
    #allocation6 [shape = 'u8[2048]{0}', space=vmem, size = 0x800, scoped, tag = 'input window, operand 2, single buffered']
    %8 = vsyncpa [#allocation3], 0
    %9 = vsyncpa [#allocation5], 0
    // Predicated region
    $region2: #{tpu_custom_call.1} parent=1 // pred_check
      _
    $region3: #{tpu_custom_call.1} parent=1 // pred_check_branch
      %11 = sbr.rel (0) target = $region5
    $region4: #{tpu_custom_call.1} parent=1 // pred_region
      %13 = vsyncadd [#allocation3], 0
      %s15 = sshll.u32 %s0, 4
      %s16 = int_to_ptr.hbm [resolvable:$true] %s15
      %s17 = sshll.u32 [#allocation2], 4
      %s18 = int_to_ptr.vmem [resolvable:$true] %s17
      %20 = dma.hbm_to_vmem [thread:$0]  %s16, 16, %s18, [#allocation3]
    $region5: #{tpu_custom_call.1} parent=1 // pred_fallthru
      _
    // Predicated region
    $region6: #{tpu_custom_call.1} parent=1 // pred_check
      _
    $region7: #{tpu_custom_call.1} parent=1 // pred_check_branch
      %22 = sbr.rel (0) target = $region9
    $region8: #{tpu_custom_call.1} parent=1 // pred_region
      %24 = vsyncadd [#allocation5], 0
      %s26 = sshll.u32 %s1, 4
      %s27 = int_to_ptr.hbm [resolvable:$true] %s26
      %s28 = sshll.u32 [#allocation4], 4
      %s29 = int_to_ptr.vmem [resolvable:$true] %s28
      %31 = dma.hbm_to_vmem [thread:$0]  %s27, 64, %s29, [#allocation5]
    $region9: #{tpu_custom_call.1} parent=1 // pred_fallthru
      _
    // Predicated region
    $region10: #{tpu_custom_call.1} parent=1 // pred_check
      _
    $region11: #{tpu_custom_call.1} parent=1 // pred_check_branch
      %33 = sbr.rel (0) target = $region13
    $region12: #{tpu_custom_call.1} parent=1 // pred_region
      %35 = vsyncadd [#allocation5], 0
      %s37 = sshll.u32 %s2, 4
      %s38 = int_to_ptr.hbm [resolvable:$true] %s37
      %s39 = sshll.u32 [#allocation6], 4
      %s40 = int_to_ptr.vmem [resolvable:$true] %s39
      %42 = dma.hbm_to_vmem [thread:$0]  %s38, 64, %s40, [#allocation5]
    $region13: #{tpu_custom_call.1} parent=1 // pred_fallthru
      _
    // Predicated region
    $region14: #{tpu_custom_call.1} parent=1 // pred_check
      _
    $region15: #{tpu_custom_call.1} parent=1 // pred_check_branch
      %44 = sbr.rel (0) target = $region17
    $region16: #{tpu_custom_call.1} parent=1 // pred_region
      %46 = dma.done [#allocation3], 16
    $region17: #{tpu_custom_call.1} parent=1 // pred_fallthru
      _
    // Predicated region
    $region18: #{tpu_custom_call.1} parent=1 // pred_check
      _
    $region19: #{tpu_custom_call.1} parent=1 // pred_check_branch
      %48 = sbr.rel (0) target = $region21
    $region20: #{tpu_custom_call.1} parent=1 // pred_region
      %50 = dma.done [#allocation5], 64
    $region21: #{tpu_custom_call.1} parent=1 // pred_fallthru
      _
    // Predicated region
    $region22: #{tpu_custom_call.1} parent=1 // pred_check
      _
    $region23: #{tpu_custom_call.1} parent=1 // pred_check_branch
      %52 = sbr.rel (0) target = $region25
    $region24: #{tpu_custom_call.1} parent=1 // pred_region
      %54 = dma.done [#allocation5], 64
    $region25: #{tpu_custom_call.1} parent=1 // pred_fallthru
      _
    %v55 = vld [vmem:[#allocation4] sm:$0xf]
    %v56 = vld [vmem:[#allocation6] sm:$0xf]
    %v57 = vld [vmem:[#allocation2] sm:$0x1]
    %v58 = vsub.f32 1.0, %v57
    %v60 = vperm.slane %v57, 0
    %v62 = vmul.f32 %v56, %v60
    %v63 = vsub.f32 0.0, %v62
    %v64 = vmul.f32 %v55, %v60
    %v66 = vperm.slane %v58, 0
    %v68 = vadd.f32 %v64, %v66
    %v69 = vlog2.pop %v68
    %v70 = vmul.f32 %v69, 0.6931472
    %v71 = vmul.f32 %v63, %v70
    %v72 = vsub.f32 %v55, %v56
    %v73 = vmul.f32 %v72, %v72
    %v74 = vmul.f32 %v73, %v66
    %v75 = vadd.f32 %v71, %v74
    %vm76 = vcmask 527360
    %v77 = vsel %vm76, %v75, 0.0
    %78 = vadd.xlane.f32.xlu0 %v77
    %v79 = vpop.xlane.xlu0 %78
    %s80 = smul.u32 0, 4
    %v81 = vlaneseq
    %v82 = vshrl.u32 %v81, 7
    %v83 = vstv %s80
    %v84 = vadd.s32 %v83, %v82
    %vm85 = vcmp.lt.s32.totalorder %v84, 4
    %v86 = vsel %vm85, %v79, 0.0
    %vm87 = vcmask 3072
    %88 = vst.msk [vmem:[%s3] sm:$0xf] %vm87, %v86
    // Predicated region
    $region26: #{tpu_custom_call.1} parent=1 // pred_check
      _
    $region27: #{tpu_custom_call.1} parent=1 // pred_check_branch
      %90 = sbr.rel (0) target = $region29
    $region28: #{tpu_custom_call.1} parent=1 // pred_region
      _
    $region29: #{tpu_custom_call.1} parent=1 // pred_fallthru
      _
    // Predicated region
    $region30: #{tpu_custom_call.1} parent=1 // pred_check
      _
    $region31: #{tpu_custom_call.1} parent=1 // pred_check_branch
      %92 = sbr.rel (0) target = $region33
    $region32: #{tpu_custom_call.1} parent=1 // pred_region
      _
    $region33: #{tpu_custom_call.1} parent=1 // pred_fallthru
      _
    %93 = vsyncpa [#allocation3], 1
    %94 = vsyncpa [#allocation5], 1

</llo_original>
